<compile_context>
chip_gen: v6e
topology: v6e:2x2x1
jax: 0.10.0
libtpu: 0.0.40
codegen_flags: <defaults>
</compile_context>

<pallas_src>
import functools

import jax
import jax.numpy as jnp
from jax import lax
from jax.experimental import pallas as pl
from jax.experimental.pallas import tpu as pltpu

_LANE = 128
_SUBLANE = 8


def _round_up(x, m):
    return ((x + m - 1) // m) * m


def _mlp_kernel(x_ref, w1_ref, b1_ref, w2_ref, b2_ref, o_ref):
    # hidden = relu(x @ W1^T + b1); contraction over the shared last axis (D_in),
    # so the PyTorch [H, D_in] weight layout feeds the MXU with no transpose.
    h = lax.dot_general(
        x_ref[...], w1_ref[...],
        dimension_numbers=(((1,), (1,)), ((), ())),
        preferred_element_type=jnp.float32,
    )                                                # [B_tile, H]  (MXU, f32 acc)
    h = jnp.maximum(h + b1_ref[...], 0.0)            # bias + ReLU on VPU, f32

    # ratings^T = W2_pad8 @ hidden^T: contract over H, batch lands on the lane axis.
    # Output block is [D_out_pad8, B_tile] -> full, unmasked lane-dense stores with
    # only 8 (not 128) padded rows of writeback.
    out = lax.dot_general(
        w2_ref[...], h.astype(w2_ref.dtype),
        dimension_numbers=(((1,), (1,)), ((), ())),
        preferred_element_type=jnp.float32,
    )                                                # [D_out_pad8, B_tile]
    o_ref[...] = (out + b2_ref[...]).astype(o_ref.dtype)


@functools.partial(
    jax.jit, static_argnames=("block_b", "min_pallas_batch", "mxu_dtype")
)
def transformer_recommender(
    x, w1, b1, w2, b2, *, block_b=2048, min_pallas_batch=1024, mxu_dtype=jnp.float32
):
    """x: [B, D_in], w1: [H, D_in], b1: [H], w2: [D_out, H], b2: [D_out].

    Returns ratings: [B, D_out] f32 (same math as the PyTorch forward).
    Set mxu_dtype=jnp.bfloat16 to halve MXU-operand HBM traffic (f32 accumulation).
    """
    B, D_in = x.shape
    H = w1.shape[0]
    D_out = w2.shape[0]

    if B < min_pallas_batch:
        # Small-batch fallback: one fused XLA dot matches/beats pallas_call overhead.
        h = jnp.maximum(
            x.astype(jnp.float32) @ w1.astype(jnp.float32).T + b1.reshape(1, H), 0.0
        )
        return h @ w2.astype(jnp.float32).T + b2.reshape(1, D_out)

    b1 = b1.reshape(1, H).astype(jnp.float32)

    # Pad D_out only to a sublane multiple (8); batch rides the lane axis instead.
    d_out_pad = _round_up(D_out, _SUBLANE)
    w2_pad = (
        jnp.zeros((d_out_pad, H), mxu_dtype).at[:D_out, :].set(w2.astype(mxu_dtype))
    )
    b2_pad = (
        jnp.zeros((d_out_pad, 1), jnp.float32)
        .at[:D_out, 0]
        .set(b2.reshape(D_out).astype(jnp.float32))
    )

    # Batch tile: multiple of 128 (lane-dense transposed output), as large as block_b,
    # but keep >= 2 grid steps when the batch allows it so v7x megacore uses both TCs.
    b_tile = _round_up(min(block_b, _round_up(B, _LANE)), _LANE)
    b_pad = _round_up(B, b_tile)
    if B > _LANE and b_pad // b_tile < 2:
        b_tile = max(_LANE, _round_up(-(-B // 2), _LANE))
        b_pad = _round_up(B, b_tile)
    if b_pad != B:
        x = jnp.pad(x, ((0, b_pad - B), (0, 0)))
    grid = (b_pad // b_tile,)

    # TODO(synk): if xprof shows exposed output-write DMA, add
    # pipeline_mode=pl.Buffered(3) on the x / out BlockSpecs.
    out_t = pl.pallas_call(
        _mlp_kernel,
        out_shape=jax.ShapeDtypeStruct((d_out_pad, b_pad), jnp.float32),
        grid=grid,
        in_specs=[
            pl.BlockSpec((b_tile, D_in), lambda i: (i, 0)),       # x: tiled over batch
            pl.BlockSpec((H, D_in), lambda i: (0, 0)),            # W1: VMEM-resident
            pl.BlockSpec((1, H), lambda i: (0, 0)),               # b1: VMEM-resident
            pl.BlockSpec((d_out_pad, H), lambda i: (0, 0)),       # W2 (8-row pad): resident
            pl.BlockSpec((d_out_pad, 1), lambda i: (0, 0)),       # b2 (8-row pad): resident
        ],
        out_specs=pl.BlockSpec((d_out_pad, b_tile), lambda i: (0, i)),
        compiler_params=pltpu.CompilerParams(
            dimension_semantics=("parallel",),        # batch axis -> megacore sharding
            vmem_limit_bytes=32 * 1024 * 1024,        # v5e default is only 16 MiB
        ),
    )(x.astype(mxu_dtype), w1.astype(mxu_dtype), b1, w2_pad, b2_pad)

    # [D_out_pad, B_pad] -> [B, D_out]; tiny slice+transpose handled by XLA.
    return out_t[:D_out, :B].T


def init_params(key, input_size, hidden_size=128, output_size=1):
    """Deterministic synthetic init mirroring nn.Linear shapes (PyTorch-style uniform)."""
    k1, k2, k3, k4 = jax.random.split(key, 4)
    bound1 = 1.0 / jnp.sqrt(input_size)
    bound2 = 1.0 / jnp.sqrt(hidden_size)
    w1 = jax.random.uniform(k1, (hidden_size, input_size), jnp.float32, -bound1, bound1)
    b1 = jax.random.uniform(k2, (hidden_size,), jnp.float32, -bound1, bound1)
    w2 = jax.random.uniform(k3, (output_size, hidden_size), jnp.float32, -bound2, bound2)
    b2 = jax.random.uniform(k4, (output_size,), jnp.float32, -bound2, bound2)
    return w1, b1, w2, b2


if __name__ == "__main__":
    key = jax.random.PRNGKey(0)
    kx, kp, kx2 = jax.random.split(key, 3)

    input_size, hidden_size, output_size = 32, 128, 1
    w1, b1, w2, b2 = init_params(kp, input_size, hidden_size, output_size)

    def ref_fn(xx):
        return jnp.maximum(xx @ w1.T + b1[None, :], 0.0) @ w2.T + b2[None, :]

    # 1) Small batch forced through the Pallas kernel, exact f32 math.
    x_small = jax.random.normal(kx, (8, input_size), jnp.float32)
    out_small = jax.block_until_ready(
        transformer_recommender(x_small, w1, b1, w2, b2, min_pallas_batch=0)
    )
    assert out_small.shape == (8, output_size), out_small.shape
    assert jnp.allclose(out_small, ref_fn(x_small), atol=1e-5, rtol=1e-5), float(
        jnp.max(jnp.abs(out_small - ref_fn(x_small)))
    )

    # 2) Non-multiple-of-128 batch: exercises padding + a 2-step grid, f32 kernel path.
    x_med = jax.random.normal(kx2, (384, input_size), jnp.float32)
    out_med = jax.block_until_ready(
        transformer_recommender(x_med, w1, b1, w2, b2, min_pallas_batch=0)
    )
    assert out_med.shape == (384, output_size), out_med.shape
    assert jnp.allclose(out_med, ref_fn(x_med), atol=1e-5, rtol=1e-5), float(
        jnp.max(jnp.abs(out_med - ref_fn(x_med)))
    )

    # 3) bf16 MXU-operand path (f32 accumulation) — looser tolerance.
    out_bf16 = jax.block_until_ready(
        transformer_recommender(
            x_med, w1, b1, w2, b2, min_pallas_batch=0, mxu_dtype=jnp.bfloat16
        )
    )
    assert jnp.allclose(out_bf16, ref_fn(x_med), atol=5e-2, rtol=5e-2)

    # 4) Default auto path at small batch -> plain XLA fallback, same numbers.
    out_auto = jax.block_until_ready(transformer_recommender(x_small, w1, b1, w2, b2))
    assert jnp.allclose(out_auto, ref_fn(x_small), atol=1e-5, rtol=1e-5)

    print("KERNEL_OK")
</pallas_src>

<mosaic_0001>
module attributes {stable_mosaic.version = 11 : i64} {
  func.func @_mlp_kernel(%arg0: i32, %arg1: memref<128x32xf32, #tpu.memory_space<vmem>>, %arg2: memref<128x32xf32, #tpu.memory_space<vmem>>, %arg3: memref<1x128xf32, #tpu.memory_space<vmem>>, %arg4: memref<8x128xf32, #tpu.memory_space<vmem>>, %arg5: memref<8x1xf32, #tpu.memory_space<vmem>>, %arg6: memref<8x128xf32, #tpu.memory_space<vmem>>) attributes {dimension_semantics = [#tpu.dimension_semantics<parallel>], iteration_bounds = array<i64: 1>, scalar_prefetch = 0 : i64, scratch_operands = 0 : i64, tpu.core_type = #tpu.core_type<tc>, window_params = [{transform_indices = @transform_0, window_bounds = array<i64: 128, 32>}, {pipeline_mode = #tpu.pipeline_mode<synchronous>, transform_indices = @transform_1, window_bounds = array<i64: 128, 32>}, {pipeline_mode = #tpu.pipeline_mode<synchronous>, transform_indices = @transform_2, window_bounds = array<i64: 1, 128>}, {pipeline_mode = #tpu.pipeline_mode<synchronous>, transform_indices = @transform_3, window_bounds = array<i64: 8, 128>}, {pipeline_mode = #tpu.pipeline_mode<synchronous>, transform_indices = @transform_4, window_bounds = array<i64: 8, 1>}, {transform_indices = @transform_5, window_bounds = array<i64: 8, 128>}]} {
    %c0 = arith.constant 0 : index
    %c0_0 = arith.constant 0 : index
    %0 = vector.load %arg1[%c0, %c0_0] : memref<128x32xf32, #tpu.memory_space<vmem>>, vector<128x32xf32>
    %c0_1 = arith.constant 0 : index
    %c0_2 = arith.constant 0 : index
    %1 = vector.load %arg2[%c0_1, %c0_2] : memref<128x32xf32, #tpu.memory_space<vmem>>, vector<128x32xf32>
    %cst = arith.constant dense<0.000000e+00> : vector<128x128xf32>
    %2 = tpu.matmul %0, %1, %cst {dimension_numbers = #tpu.dot_dimension_numbers<[1], [1], [0], [0], [0, 0, 1, 0], [], []>} : vector<128x32xf32>, vector<128x32xf32>, vector<128x128xf32> -> vector<128x128xf32>
    %c0_3 = arith.constant 0 : index
    %c0_4 = arith.constant 0 : index
    %3 = vector.load %arg3[%c0_3, %c0_4] : memref<1x128xf32, #tpu.memory_space<vmem>>, vector<1x128xf32>
    %4 = vector.broadcast %3 : vector<1x128xf32> to vector<128x128xf32>
    %5 = arith.addf %2, %4 : vector<128x128xf32>
    %cst_5 = arith.constant 0.000000e+00 : f32
    %6 = vector.broadcast %cst_5 : f32 to vector<128x128xf32>
    %7 = arith.maximumf %5, %6 : vector<128x128xf32>
    %c0_6 = arith.constant 0 : index
    %c0_7 = arith.constant 0 : index
    %8 = vector.load %arg4[%c0_6, %c0_7] : memref<8x128xf32, #tpu.memory_space<vmem>>, vector<8x128xf32>
    %cst_8 = arith.constant dense<0.000000e+00> : vector<8x128xf32>
    %9 = tpu.matmul %8, %7, %cst_8 {dimension_numbers = #tpu.dot_dimension_numbers<[1], [1], [0], [0], [0, 0, 1, 0], [], []>} : vector<8x128xf32>, vector<128x128xf32>, vector<8x128xf32> -> vector<8x128xf32>
    %c0_9 = arith.constant 0 : index
    %c0_10 = arith.constant 0 : index
    %10 = vector.load %arg5[%c0_9, %c0_10] : memref<8x1xf32, #tpu.memory_space<vmem>>, vector<8x1xf32>
    %11 = vector.broadcast %10 : vector<8x1xf32> to vector<8x128xf32>
    %12 = arith.addf %9, %11 : vector<8x128xf32>
    %c0_11 = arith.constant 0 : index
    %c0_12 = arith.constant 0 : index
    %13 = vector.load %arg6[%c0_11, %c0_12] : memref<8x128xf32, #tpu.memory_space<vmem>>, vector<8x128xf32>
    tpu.vector_store %arg6[%c0_11, %c0_12], %12 {strides = array<i32>} : memref<8x128xf32, #tpu.memory_space<vmem>>, vector<8x128xf32>,
    return
  }
  func.func @transform_0(%arg0: i32) -> (i32, i32) {
    %c0_i32 = arith.constant 0 : i32
    %c0_i32_0 = arith.constant 0 : i32
    return %arg0, %c0_i32 : i32, i32
  }
  func.func @transform_1(%arg0: i32) -> (i32, i32) {
    %c0_i32 = arith.constant 0 : i32
    %c0_i32_0 = arith.constant 0 : i32
    %c0_i32_1 = arith.constant 0 : i32
    return %c0_i32, %c0_i32_0 : i32, i32
  }
  func.func @transform_2(%arg0: i32) -> (i32, i32) {
    %c0_i32 = arith.constant 0 : i32
    %c0_i32_0 = arith.constant 0 : i32
    %c0_i32_1 = arith.constant 0 : i32
    return %c0_i32, %c0_i32_0 : i32, i32
  }
  func.func @transform_3(%arg0: i32) -> (i32, i32) {
    %c0_i32 = arith.constant 0 : i32
    %c0_i32_0 = arith.constant 0 : i32
    %c0_i32_1 = arith.constant 0 : i32
    return %c0_i32, %c0_i32_0 : i32, i32
  }
  func.func @transform_4(%arg0: i32) -> (i32, i32) {
    %c0_i32 = arith.constant 0 : i32
    %c0_i32_0 = arith.constant 0 : i32
    %c0_i32_1 = arith.constant 0 : i32
    return %c0_i32, %c0_i32_0 : i32, i32
  }
  func.func @transform_5(%arg0: i32) -> (i32, i32) {
    %c0_i32 = arith.constant 0 : i32
    %c0_i32_0 = arith.constant 0 : i32
    return %c0_i32, %arg0 : i32, i32
  }
}

</mosaic_0001>

<llo_original>
// kernel: transformer_recommender.1
$region0: #{transformer_recommender.1}
  #allocation0 [shape = 'u32[]', space=smem, size = 0x4, offset = 0x4, fixed_abs, tag = 'smem constant byte address 0x4 - core index']
  #allocation1 [shape = 'u32[144,128]{1,0:T(1,128)}', space=vmem, size = 0x12000, scoped, tag = 'internal scratch']
  %s0 = inlined_call_operand.vmem [shape: f32[128,32], index: 0, kind: input, shape index: {}]
  %s1 = inlined_call_operand.vmem [shape: f32[128,32], index: 1, kind: input, shape index: {}]
  %s2 = inlined_call_operand.vmem [shape: f32[1,128], index: 2, kind: input, shape index: {}]
  %s3 = inlined_call_operand.vmem [shape: f32[8,128], index: 3, kind: input, shape index: {}]
  %s4 = inlined_call_operand.vmem [shape: f32[8,1], index: 4, kind: input, shape index: {}]
  %s5 = inlined_call_operand.vmem [shape: f32[8,128], index: 5, kind: output, shape index: {}]
  %s6 = sld [smem:[#allocation0]]
  $region30: #{transformer_recommender.1} parent=0
    _
  %s8 = ssub.s32 1, %s6
  %s9 = scalar_select 0, %s8, %s6
  // Predicated region
  $region2: #{transformer_recommender.1} parent=0 // pred_check
    _
  $region3: #{transformer_recommender.1} parent=0 // pred_check_branch
    %11 = sbr.rel (0) target = $region5
  $region4: #{transformer_recommender.1} parent=0 // pred_region
    _
  $region5: #{transformer_recommender.1} parent=0 // pred_fallthru
    _
  // Predicated region
  $region6: #{transformer_recommender.1} parent=0 // pred_check
    _
  $region7: #{transformer_recommender.1} parent=0 // pred_check_branch
    %13 = sbr.rel (0) target = $region9
  $region8: #{transformer_recommender.1} parent=0 // pred_region
    _
  $region9: #{transformer_recommender.1} parent=0 // pred_fallthru
    _
  // Predicated region
  $region10: #{transformer_recommender.1} parent=0 // pred_check
    _
  $region11: #{transformer_recommender.1} parent=0 // pred_check_branch
    %15 = sbr.rel (0) target = $region13
  $region12: #{transformer_recommender.1} parent=0 // pred_region
    _
  $region13: #{transformer_recommender.1} parent=0 // pred_fallthru
    _
  // Predicated region
  $region14: #{transformer_recommender.1} parent=0 // pred_check
    _
  $region15: #{transformer_recommender.1} parent=0 // pred_check_branch
    %17 = sbr.rel (0) target = $region17
  $region16: #{transformer_recommender.1} parent=0 // pred_region
    _
  $region17: #{transformer_recommender.1} parent=0 // pred_fallthru
    _
  // Predicated region
  $region18: #{transformer_recommender.1} parent=0 // pred_check
    _
  $region19: #{transformer_recommender.1} parent=0 // pred_check_branch
    %19 = sbr.rel (0) target = $region21
  $region20: #{transformer_recommender.1} parent=0 // pred_region
    _
  $region21: #{transformer_recommender.1} parent=0 // pred_fallthru
    _
  %v20 = vld [vmem:[%s0] sm:$0xff]
  %v21 = vld [vmem:[%s0 + $0x8] sm:$0xff]
  %v22 = vld [vmem:[%s0 + $0x10] sm:$0xff]
  %v23 = vld [vmem:[%s0 + $0x18] sm:$0xff]
  %v24 = vld [vmem:[%s0 + $0x20] sm:$0xff]
  %v25 = vld [vmem:[%s0 + $0x28] sm:$0xff]
  %v26 = vld [vmem:[%s0 + $0x30] sm:$0xff]
  %v27 = vld [vmem:[%s0 + $0x38] sm:$0xff]
  %v28 = vld [vmem:[%s0 + $0x40] sm:$0xff]
  %v29 = vld [vmem:[%s0 + $0x48] sm:$0xff]
  %v30 = vld [vmem:[%s0 + $0x50] sm:$0xff]
  %v31 = vld [vmem:[%s0 + $0x58] sm:$0xff]
  %v32 = vld [vmem:[%s0 + $0x60] sm:$0xff]
  %v33 = vld [vmem:[%s0 + $0x68] sm:$0xff]
  %v34 = vld [vmem:[%s0 + $0x70] sm:$0xff]
  %v35 = vld [vmem:[%s0 + $0x78] sm:$0xff]
  %v36 = vld [vmem:[%s1] sm:$0xff]
  %v37 = vld [vmem:[%s1 + $0x8] sm:$0xff]
  %v38 = vld [vmem:[%s1 + $0x10] sm:$0xff]
  %v39 = vld [vmem:[%s1 + $0x18] sm:$0xff]
  %v40 = vld [vmem:[%s1 + $0x20] sm:$0xff]
  %v41 = vld [vmem:[%s1 + $0x28] sm:$0xff]
  %v42 = vld [vmem:[%s1 + $0x30] sm:$0xff]
  %v43 = vld [vmem:[%s1 + $0x38] sm:$0xff]
  %v44 = vld [vmem:[%s1 + $0x40] sm:$0xff]
  %v45 = vld [vmem:[%s1 + $0x48] sm:$0xff]
  %v46 = vld [vmem:[%s1 + $0x50] sm:$0xff]
  %v47 = vld [vmem:[%s1 + $0x58] sm:$0xff]
  %v48 = vld [vmem:[%s1 + $0x60] sm:$0xff]
  %v49 = vld [vmem:[%s1 + $0x68] sm:$0xff]
  %v50 = vld [vmem:[%s1 + $0x70] sm:$0xff]
  %v51 = vld [vmem:[%s1 + $0x78] sm:$0xff]
  %v52 = vld [vmem:[%s2] sm:$0x1]
  %v54 = vlaneseq
  %v55 = vshrl.u32 %v54, 7
  %v56 = vsub.s32 0, %v55
  %v57 = vrot.slane %v52, %v56
  %vm59 = vcmask 261120
  %v61 = vsel %vm59, %v20, 0
  %v64 = vsel %vm59, %v21, 0
  %v67 = vsel %vm59, %v22, 0
  %v70 = vsel %vm59, %v23, 0
  %v73 = vsel %vm59, %v24, 0
  %v76 = vsel %vm59, %v25, 0
  %v79 = vsel %vm59, %v26, 0
  %v82 = vsel %vm59, %v27, 0
  %v85 = vsel %vm59, %v28, 0
  %v88 = vsel %vm59, %v29, 0
  %v91 = vsel %vm59, %v30, 0
  %v94 = vsel %vm59, %v31, 0
  %v97 = vsel %vm59, %v32, 0
  %v100 = vsel %vm59, %v33, 0
  %v103 = vsel %vm59, %v34, 0
  %v106 = vsel %vm59, %v35, 0
  %v109 = vsel %vm59, %v36, 0
  %v112 = vsel %vm59, %v37, 0
  %v115 = vsel %vm59, %v38, 0
  %v118 = vsel %vm59, %v39, 0
  %v121 = vsel %vm59, %v40, 0
  %v124 = vsel %vm59, %v41, 0
  %v127 = vsel %vm59, %v42, 0
  %v130 = vsel %vm59, %v43, 0
  %v133 = vsel %vm59, %v44, 0
  %v136 = vsel %vm59, %v45, 0
  %v139 = vsel %vm59, %v46, 0
  %v142 = vsel %vm59, %v47, 0
  %v145 = vsel %vm59, %v48, 0
  %v148 = vsel %vm59, %v49, 0
  %v151 = vsel %vm59, %v50, 0
  %v154 = vsel %vm59, %v51, 0
  %156 = vmatprep.subr.mxu0 0.0
  %157 = vmatpush1.xpose.msra.mxu0 %v154
  %158 = vmatprep.subr.mxu0 0.0
  %159 = vmatpush1.xpose.msra.mxu0 %v151
  %160 = vmatprep.subr.mxu0 0.0
  %161 = vmatpush1.xpose.msra.mxu0 %v148
  %162 = vmatprep.subr.mxu0 0.0
  %163 = vmatpush1.xpose.msra.mxu0 %v145
  %164 = vmatprep.subr.mxu0 0.0
  %165 = vmatpush1.xpose.msra.mxu0 %v142
  %166 = vmatprep.subr.mxu0 0.0
  %167 = vmatpush1.xpose.msra.mxu0 %v139
  %168 = vmatprep.subr.mxu0 0.0
  %169 = vmatpush1.xpose.msra.mxu0 %v136
  %170 = vmatprep.subr.mxu0 0.0
  %171 = vmatpush1.xpose.msra.mxu0 %v133
  %172 = vmatprep.subr.mxu0 0.0
  %173 = vmatpush1.xpose.msra.mxu0 %v130
  %174 = vmatprep.subr.mxu0 0.0
  %175 = vmatpush1.xpose.msra.mxu0 %v127
  %176 = vmatprep.subr.mxu0 0.0
  %177 = vmatpush1.xpose.msra.mxu0 %v124
  %178 = vmatprep.subr.mxu0 0.0
  %179 = vmatpush1.xpose.msra.mxu0 %v121
  %180 = vmatprep.subr.mxu0 0.0
  %181 = vmatpush1.xpose.msra.mxu0 %v118
  %182 = vmatprep.subr.mxu0 0.0
  %183 = vmatpush1.xpose.msra.mxu0 %v115
  %184 = vmatprep.subr.mxu0 0.0
  %185 = vmatpush1.xpose.msra.mxu0 %v112
  %186 = vmatprep.subr.mxu0 0.0
  %187 = vmatpush1.xpose.msra.mxu0 %v109
  %188 = vmatprep.subr.mxu0 0.0
  %189 = vmatpush2.xpose.msra.mxu0 0.0
  %190 = vmatprep.subr.mxu0 0.0
  %191 = vmatpush2.xpose.msra.mxu0 0.0
  %192 = vmatprep.subr.mxu0 0.0
  %193 = vmatpush2.xpose.msra.mxu0 0.0
  %194 = vmatprep.subr.mxu0 0.0
  %195 = vmatpush2.xpose.msra.mxu0 0.0
  %196 = vmatprep.subr.mxu0 0.0
  %197 = vmatpush2.xpose.msra.mxu0 0.0
  %198 = vmatprep.subr.mxu0 0.0
  %199 = vmatpush2.xpose.msra.mxu0 0.0
  %200 = vmatprep.subr.mxu0 0.0
  %201 = vmatpush2.xpose.msra.mxu0 0.0
  %202 = vmatprep.subr.mxu0 0.0
  %203 = vmatpush2.xpose.msra.mxu0 0.0
  %204 = vmatprep.subr.mxu0 0.0
  %205 = vmatpush2.xpose.msra.mxu0 0.0
  %206 = vmatprep.subr.mxu0 0.0
  %207 = vmatpush2.xpose.msra.mxu0 0.0
  %208 = vmatprep.subr.mxu0 0.0
  %209 = vmatpush2.xpose.msra.mxu0 0.0
  %210 = vmatprep.subr.mxu0 0.0
  %211 = vmatpush2.xpose.msra.mxu0 0.0
  %212 = vmatprep.subr.mxu0 0.0
  %213 = vmatpush2.xpose.msra.mxu0 0.0
  %214 = vmatprep.subr.mxu0 0.0
  %215 = vmatpush2.xpose.msra.mxu0 0.0
  %216 = vmatprep.subr.mxu0 0.0
  %217 = vmatpush2.xpose.msra.mxu0 0.0
  %218 = vmatprep.subr.mxu0 0.0
  %219 = vmatpush2.xpose.msra.mxu0 0.0
  %220 = vmatprep.mubr.f32.mxu0 0.0
  %221 = vmatmul.mubr.f32.gmra.mxu0 %v61
  %v222 = vpop.f32.mrf.mxu0
  %v223 = vadd.f32 %v57, %v222
  %v224 = vpop.f32.mrf.mxu0
  %225 = vmatprep.mubr.f32.mxu0 0.0
  %226 = vmatmul.mubr.f32.gmra.mxu0 %v64
  %v227 = vpop.f32.mrf.mxu0
  %v228 = vadd.f32 %v57, %v227
  %v229 = vpop.f32.mrf.mxu0
  %230 = vmatprep.mubr.f32.mxu0 0.0
  %231 = vmatmul.mubr.f32.gmra.mxu0 %v67
  %v232 = vpop.f32.mrf.mxu0
  %v233 = vadd.f32 %v57, %v232
  %v234 = vpop.f32.mrf.mxu0
  %235 = vmatprep.mubr.f32.mxu0 0.0
  %236 = vmatmul.mubr.f32.gmra.mxu0 %v70
  %v237 = vpop.f32.mrf.mxu0
  %v238 = vadd.f32 %v57, %v237
  %v239 = vpop.f32.mrf.mxu0
  %240 = vmatprep.mubr.f32.mxu0 0.0
  %241 = vmatmul.mubr.f32.gmra.mxu0 %v73
  %v242 = vpop.f32.mrf.mxu0
  %v243 = vadd.f32 %v57, %v242
  %v244 = vpop.f32.mrf.mxu0
  %245 = vmatprep.mubr.f32.mxu0 0.0
  %246 = vmatmul.mubr.f32.gmra.mxu0 %v76
  %v247 = vpop.f32.mrf.mxu0
  %v248 = vadd.f32 %v57, %v247
  %v249 = vpop.f32.mrf.mxu0
  %250 = vmatprep.mubr.f32.mxu0 0.0
  %251 = vmatmul.mubr.f32.gmra.mxu0 %v79
  %v252 = vpop.f32.mrf.mxu0
  %v253 = vadd.f32 %v57, %v252
  %v254 = vpop.f32.mrf.mxu0
  %255 = vmatprep.mubr.f32.mxu0 0.0
  %256 = vmatmul.mubr.f32.gmra.mxu0 %v82
  %v257 = vpop.f32.mrf.mxu0
  %v258 = vadd.f32 %v57, %v257
  %v259 = vpop.f32.mrf.mxu0
  %260 = vmatprep.mubr.f32.mxu0 0.0
  %261 = vmatmul.mubr.f32.gmra.mxu0 %v85
  %v262 = vpop.f32.mrf.mxu0
  %v263 = vadd.f32 %v57, %v262
  %v264 = vpop.f32.mrf.mxu0
  %265 = vmatprep.mubr.f32.mxu0 0.0
  %266 = vmatmul.mubr.f32.gmra.mxu0 %v88
  %v267 = vpop.f32.mrf.mxu0
  %v268 = vadd.f32 %v57, %v267
  %v269 = vpop.f32.mrf.mxu0
  %270 = vmatprep.mubr.f32.mxu0 0.0
  %271 = vmatmul.mubr.f32.gmra.mxu0 %v91
  %v272 = vpop.f32.mrf.mxu0
  %v273 = vadd.f32 %v57, %v272
  %v274 = vpop.f32.mrf.mxu0
  %275 = vmatprep.mubr.f32.mxu0 0.0
  %276 = vmatmul.mubr.f32.gmra.mxu0 %v94
  %v277 = vpop.f32.mrf.mxu0
  %v278 = vadd.f32 %v57, %v277
  %v279 = vpop.f32.mrf.mxu0
  %280 = vmatprep.mubr.f32.mxu0 0.0
  %281 = vmatmul.mubr.f32.gmra.mxu0 %v97
  %v282 = vpop.f32.mrf.mxu0
  %v283 = vadd.f32 %v57, %v282
  %v284 = vpop.f32.mrf.mxu0
  %285 = vmatprep.mubr.f32.mxu0 0.0
  %286 = vmatmul.mubr.f32.gmra.mxu0 %v100
  %v287 = vpop.f32.mrf.mxu0
  %v288 = vadd.f32 %v57, %v287
  %v289 = vpop.f32.mrf.mxu0
  %290 = vmatprep.mubr.f32.mxu0 0.0
  %291 = vmatmul.mubr.f32.gmra.mxu0 %v103
  %v292 = vpop.f32.mrf.mxu0
  %v293 = vadd.f32 %v57, %v292
  %v294 = vpop.f32.mrf.mxu0
  %295 = vmatprep.mubr.f32.mxu0 0.0
  %296 = vmatmul.mubr.f32.gmra.mxu0 %v106
  %v297 = vpop.f32.mrf.mxu0
  %v298 = vadd.f32 %v57, %v297
  %v299 = vpop.f32.mrf.mxu0
  %300 = vdwg.mxu0
  %v301 = vmax.f32 %v223, 0.0
  %v302 = vmax.f32 %v228, 0.0
  %v303 = vmax.f32 %v233, 0.0
  %v304 = vmax.f32 %v238, 0.0
  %v305 = vmax.f32 %v243, 0.0
  %v306 = vmax.f32 %v248, 0.0
  %v307 = vmax.f32 %v253, 0.0
  %v308 = vmax.f32 %v258, 0.0
  %v309 = vmax.f32 %v263, 0.0
  %v310 = vmax.f32 %v268, 0.0
  %v311 = vmax.f32 %v273, 0.0
  %v312 = vmax.f32 %v278, 0.0
  %v313 = vmax.f32 %v283, 0.0
  %v314 = vmax.f32 %v288, 0.0
  %v315 = vmax.f32 %v293, 0.0
  %v316 = vmax.f32 %v298, 0.0
  %v317 = vld [vmem:[%s3] sm:$0xff]
  %v318 = vld [vmem:[%s4] sm:$0xff]
  %320 = vset.pattern.permute.xlu0 0
  %321 = vperm.xlu0 %320, %v318
  %v322 = vpop.permute.xlu0 %321
  %324 = vmatprep.subr.mxu0 0.0
  %325 = vmatpush1.xpose.msra.mxu0 %v316
  %326 = vmatprep.subr.mxu0 0.0
  %327 = vmatpush1.xpose.msra.mxu0 %v315
  %328 = vmatprep.subr.mxu0 0.0
  %329 = vmatpush1.xpose.msra.mxu0 %v314
  %330 = vmatprep.subr.mxu0 0.0
  %331 = vmatpush1.xpose.msra.mxu0 %v313
  %332 = vmatprep.subr.mxu0 0.0
  %333 = vmatpush1.xpose.msra.mxu0 %v312
  %334 = vmatprep.subr.mxu0 0.0
  %335 = vmatpush1.xpose.msra.mxu0 %v311
  %336 = vmatprep.subr.mxu0 0.0
  %337 = vmatpush1.xpose.msra.mxu0 %v310
  %338 = vmatprep.subr.mxu0 0.0
  %339 = vmatpush1.xpose.msra.mxu0 %v309
  %340 = vmatprep.subr.mxu0 0.0
  %341 = vmatpush1.xpose.msra.mxu0 %v308
  %342 = vmatprep.subr.mxu0 0.0
  %343 = vmatpush1.xpose.msra.mxu0 %v307
  %344 = vmatprep.subr.mxu0 0.0
  %345 = vmatpush1.xpose.msra.mxu0 %v306
  %346 = vmatprep.subr.mxu0 0.0
  %347 = vmatpush1.xpose.msra.mxu0 %v305
  %348 = vmatprep.subr.mxu0 0.0
  %349 = vmatpush1.xpose.msra.mxu0 %v304
  %350 = vmatprep.subr.mxu0 0.0
  %351 = vmatpush1.xpose.msra.mxu0 %v303
  %352 = vmatprep.subr.mxu0 0.0
  %353 = vmatpush1.xpose.msra.mxu0 %v302
  %354 = vmatprep.subr.mxu0 0.0
  %355 = vmatpush1.xpose.msra.mxu0 %v301
  %356 = vmatprep.subr.mxu0 0.0
  %357 = vmatpush2.xpose.msra.mxu0 0.0
  %358 = vmatprep.subr.mxu0 0.0
  %359 = vmatpush2.xpose.msra.mxu0 0.0
  %360 = vmatprep.subr.mxu0 0.0
  %361 = vmatpush2.xpose.msra.mxu0 0.0
  %362 = vmatprep.subr.mxu0 0.0
  %363 = vmatpush2.xpose.msra.mxu0 0.0
  %364 = vmatprep.subr.mxu0 0.0
  %365 = vmatpush2.xpose.msra.mxu0 0.0
  %366 = vmatprep.subr.mxu0 0.0
  %367 = vmatpush2.xpose.msra.mxu0 0.0
  %368 = vmatprep.subr.mxu0 0.0
  %369 = vmatpush2.xpose.msra.mxu0 0.0
  %370 = vmatprep.subr.mxu0 0.0
  %371 = vmatpush2.xpose.msra.mxu0 0.0
  %372 = vmatprep.subr.mxu0 0.0
  %373 = vmatpush2.xpose.msra.mxu0 0.0
  %374 = vmatprep.subr.mxu0 0.0
  %375 = vmatpush2.xpose.msra.mxu0 0.0
  %376 = vmatprep.subr.mxu0 0.0
  %377 = vmatpush2.xpose.msra.mxu0 0.0
  %378 = vmatprep.subr.mxu0 0.0
  %379 = vmatpush2.xpose.msra.mxu0 0.0
  %380 = vmatprep.subr.mxu0 0.0
  %381 = vmatpush2.xpose.msra.mxu0 0.0
  %382 = vmatprep.subr.mxu0 0.0
  %383 = vmatpush2.xpose.msra.mxu0 0.0
  %384 = vmatprep.subr.mxu0 0.0
  %385 = vmatpush2.xpose.msra.mxu0 0.0
  %386 = vmatprep.subr.mxu0 0.0
  %387 = vmatpush2.xpose.msra.mxu0 0.0
  %388 = vmatprep.mubr.f32.mxu0 0.0
  %389 = vmatmul.mubr.f32.gmra.mxu0 %v317
  %v390 = vpop.f32.mrf.mxu0
  %v391 = vadd.f32 %v322, %v390
  %v392 = vpop.f32.mrf.mxu0
  %393 = vdwg.mxu0
  %394 = vst [vmem:[%s5] sm:$0xff] %v391
  // Predicated region
  $region22: #{transformer_recommender.1} parent=0 // pred_check
    _
  $region23: #{transformer_recommender.1} parent=0 // pred_check_branch
    %396 = sbr.rel (0) target = $region25
  $region24: #{transformer_recommender.1} parent=0 // pred_region
    _
  $region25: #{transformer_recommender.1} parent=0 // pred_fallthru
    _
  // Predicated region
  $region26: #{transformer_recommender.1} parent=0 // pred_check
    _
  $region27: #{transformer_recommender.1} parent=0 // pred_check_branch
    %398 = sbr.rel (0) target = $region29
  $region28: #{transformer_recommender.1} parent=0 // pred_region
    _
  $region29: #{transformer_recommender.1} parent=0 // pred_fallthru
    _

</llo_original>
